<compile_context>
chip_gen: v7x
topology: tpu7x:2x2x1
jax: 0.10.0
libtpu: 0.0.40
codegen_flags: <defaults>
</compile_context>

<pallas_src>
import functools

import jax
import jax.numpy as jnp
from jax.experimental import pallas as pl
from jax.experimental.pallas import tpu as pltpu


def _attention_kernel(enc_ref, hidproj_ref, w_enc_ref, v_ref, out_ref, score_ref,
                      *, seq_len, t_tile, n_t_tiles, use_bf16_matmul):
    # enc_ref:     (bc, tt, 2E)   encoder-output tile (streamed)
    # hidproj_ref: (bc, D)        precomputed hidden @ W_hid + b (resident over T)
    # w_enc_ref:   (2E, D)        encoder-side weight (resident)
    # v_ref:       (1, D)         scoring vector (resident)
    # out_ref:     (bc, T)        lane-dense softmax output (resident over T axis)
    # score_ref:   (nt, bc, tt)   VMEM scratch holding raw scores per T tile
    ti = pl.program_id(1)
    bc, tt, two_e = enc_ref.shape
    d = w_enc_ref.shape[1]

    # Single MXU contraction per step; bc*tt % 8 == 0 keeps the reshape a no-op.
    enc_flat = enc_ref[...].reshape(bc * tt, two_e)
    w_enc = w_enc_ref[...]
    if use_bf16_matmul:
        enc_flat = enc_flat.astype(jnp.bfloat16)
        w_enc = w_enc.astype(jnp.bfloat16)
    proj = jnp.dot(enc_flat, w_enc, preferred_element_type=jnp.float32)
    proj = proj.reshape(bc, tt, d) + hidproj_ref[...][:, None, :]
    energy = jnp.tanh(proj)                               # (bc, tt, D) f32

    # score = energy @ v as a VPU multiply + lane reduce (no width-1 MXU result).
    score = jnp.sum(energy * v_ref[...], axis=-1)         # (bc, tt) f32

    if n_t_tiles == 1:
        # Whole sequence in one tile: softmax directly, no scratch round-trip.
        m = jnp.max(score, axis=-1, keepdims=True)
        p = jnp.exp(score - m)
        denom = jnp.sum(p, axis=-1, keepdims=True)
        out_ref[...] = (p * pl.reciprocal(denom, approx=False)).astype(out_ref.dtype)
        return

    # Mask pad columns of a ragged last T tile so they cannot affect the softmax.
    if seq_len % t_tile != 0:
        col = ti * t_tile + jax.lax.broadcasted_iota(jnp.int32, (bc, tt), 1)
        score = jnp.where(col < seq_len, score, -jnp.inf)

    # Deferred normalization: stash this tile's raw scores (dynamic first-axis store).
    score_ref[ti] = score

    @pl.when(ti == pl.num_programs(1) - 1)
    def _finalize():
        s = score_ref[...]                                # (nt, bc, tt)
        m = jnp.max(jnp.max(s, axis=2, keepdims=True), axis=0, keepdims=True)
        p = jnp.exp(s - m)
        denom = jnp.sum(jnp.sum(p, axis=2, keepdims=True), axis=0, keepdims=True)
        res = p * pl.reciprocal(denom, approx=False)      # (nt, bc, tt)
        for k in range(n_t_tiles):                        # static slice offsets only
            lo = k * t_tile
            hi = min(seq_len, lo + t_tile)
            out_ref[:, lo:hi] = res[k, :, : hi - lo].astype(out_ref.dtype)


def _choose_tiles(batch, seq, two_enc, *, target_block_bytes, min_steps=8):
    """VMEM-budgeted (batch, T) tile sizes; both multiples of 8 (or the full dim)."""
    elem = 4  # f32 streaming dtype

    if batch <= 8:
        bc = batch
    else:
        row_bytes = seq * two_enc * elem
        bc = max(1, min(batch, target_block_bytes // max(1, row_bytes)))
        bc = max(8, (bc // 8) * 8)

    tt = seq
    if bc * seq * two_enc * elem > target_block_bytes and seq > 8:
        cols = target_block_bytes // (bc * two_enc * elem)
        tt = int(min(seq, max(8, (cols // 8) * 8)))

    # Create enough grid steps to hide DMA behind compute and to give each
    # v7x TensorCore several pipelined steps.
    def n_steps(bc_, tt_):
        return pl.cdiv(batch, bc_) * pl.cdiv(seq, tt_)

    while n_steps(bc, tt) < min_steps and bc >= 16:
        bc = max(8, ((bc // 2) // 8) * 8)
    while n_steps(bc, tt) < min_steps and tt >= 16:
        tt = max(8, ((tt // 2) // 8) * 8)
    return int(bc), int(tt)


def attention_forward(hidden, enc_outputs, w_attn, b_attn, v_weight, *,
                      target_block_bytes=2 << 20, use_bf16_matmul=False):
    """
    hidden:      (B, dec_hid)                   float32
    enc_outputs: (B, T, 2*enc_hid)              float32
    w_attn:      (2*enc_hid + dec_hid, dec_hid) (transposed vs torch Linear weight)
    b_attn:      (dec_hid,)
    v_weight:    (dec_hid,)                     (no bias)
    returns:     (B, T) softmax attention weights
    """
    B, T, two_enc = enc_outputs.shape
    dec_hid = hidden.shape[1]

    # torch concatenates (hidden, enc_outputs): first dec_hid rows of w_attn act
    # on hidden, remaining 2*enc_hid rows act on enc_outputs.
    w_hid = w_attn[:dec_hid, :]                            # (D, D)
    w_enc = w_attn[dec_hid:, :]                            # (2E, D)

    # Hoisted hidden projection: one (B,D)x(D,D) matmul + bias in XLA, f32-exact.
    hid_proj = (jnp.dot(hidden, w_hid, precision=jax.lax.Precision.HIGHEST)
                + b_attn).astype(jnp.float32)              # (B, D)
    v = v_weight.reshape(1, dec_hid).astype(jnp.float32)   # (1, D)

    bc, tt = _choose_tiles(B, T, two_enc, target_block_bytes=target_block_bytes)
    nb = pl.cdiv(B, bc)
    nt = pl.cdiv(T, tt)

    kernel = functools.partial(
        _attention_kernel, seq_len=T, t_tile=tt, n_t_tiles=nt,
        use_bf16_matmul=use_bf16_matmul)

    out = pl.pallas_call(
        kernel,
        out_shape=jax.ShapeDtypeStruct((B, T), jnp.float32),
        grid_spec=pltpu.PrefetchScalarGridSpec(
            num_scalar_prefetch=0,
            grid=(nb, nt),
            in_specs=[
                pl.BlockSpec((bc, tt, two_enc), lambda bi, ti: (bi, ti, 0)),
                pl.BlockSpec((bc, dec_hid), lambda bi, ti: (bi, 0)),
                pl.BlockSpec((two_enc, dec_hid), lambda bi, ti: (0, 0)),
                pl.BlockSpec((1, dec_hid), lambda bi, ti: (0, 0)),
            ],
            out_specs=pl.BlockSpec((bc, T), lambda bi, ti: (bi, 0)),
            scratch_shapes=[pltpu.VMEM((nt, bc, tt), jnp.float32)],
        ),
        compiler_params=pltpu.CompilerParams(
            dimension_semantics=("parallel", "arbitrary")),
    )(enc_outputs.astype(jnp.float32), hid_proj, w_enc.astype(jnp.float32), v)

    return out                                             # (B, T), lane-dense


def reference_forward(hidden, enc_outputs, w_attn, b_attn, v_weight):
    B, T, _ = enc_outputs.shape
    h_rep = jnp.broadcast_to(hidden[:, None, :], (B, T, hidden.shape[1]))
    cat = jnp.concatenate([h_rep, enc_outputs], axis=2)
    energy = jnp.tanh(
        jnp.dot(cat, w_attn, precision=jax.lax.Precision.HIGHEST) + b_attn)
    score = jnp.dot(energy, v_weight.reshape(-1, 1),
                    precision=jax.lax.Precision.HIGHEST)[..., 0]
    return jax.nn.softmax(score, axis=1)


if __name__ == "__main__":
    # --- Small shapes consistent with the module ---------------------------
    batch = 2
    num_steps = 8
    enc_hidden_dim = 16
    dec_hidden_dim = 32
    in_dim = enc_hidden_dim * 2 + dec_hidden_dim

    key = jax.random.PRNGKey(0)
    k1, k2, k3, k4, k5 = jax.random.split(key, 5)

    hidden = jax.random.normal(k1, (batch, dec_hidden_dim), dtype=jnp.float32)
    enc_outputs = jax.random.normal(
        k2, (batch, num_steps, enc_hidden_dim * 2), dtype=jnp.float32)
    w_attn = jax.random.normal(k3, (in_dim, dec_hidden_dim), dtype=jnp.float32) * 0.1
    b_attn = jax.random.normal(k4, (dec_hidden_dim,), dtype=jnp.float32) * 0.1
    v_weight = jax.random.normal(k5, (dec_hidden_dim,), dtype=jnp.float32) * 0.1

    out = attention_forward(hidden, enc_outputs, w_attn, b_attn, v_weight)
    out = jax.block_until_ready(out)
    ref = reference_forward(hidden, enc_outputs, w_attn, b_attn, v_weight)
    assert out.shape == (batch, num_steps)
    assert jnp.allclose(out, ref, atol=1e-5, rtol=1e-5)
    assert jnp.allclose(jnp.sum(out, axis=1), jnp.ones((batch,)), atol=1e-5)

    # --- Larger shape exercising the VMEM-budgeted, T-tiled, masked path ----
    # Small block budget forces a multi-step (batch x T) grid with a ragged
    # last T tile (T2 % tt != 0), so the deferred-softmax finalize runs.
    B2, T2, EH2, DH2 = 16, 200, 64, 128
    kk = jax.random.split(jax.random.PRNGKey(1), 5)
    hidden2 = jax.random.normal(kk[0], (B2, DH2), dtype=jnp.float32)
    enc2 = jax.random.normal(kk[1], (B2, T2, 2 * EH2), dtype=jnp.float32)
    w2 = jax.random.normal(kk[2], (2 * EH2 + DH2, DH2), dtype=jnp.float32) * 0.05
    b2 = jax.random.normal(kk[3], (DH2,), dtype=jnp.float32) * 0.05
    v2 = jax.random.normal(kk[4], (DH2,), dtype=jnp.float32) * 0.05

    out2 = attention_forward(hidden2, enc2, w2, b2, v2,
                             target_block_bytes=64 * 1024)
    out2 = jax.block_until_ready(out2)
    ref2 = reference_forward(hidden2, enc2, w2, b2, v2)
    assert out2.shape == (B2, T2)
    assert jnp.allclose(out2, ref2, atol=2e-5, rtol=2e-5)
    assert jnp.allclose(jnp.sum(out2, axis=1), jnp.ones((B2,)), atol=1e-5)

    print("KERNEL_OK")
</pallas_src>

<mosaic_0001>
module attributes {stable_mosaic.version = 11 : i64} {
  func.func @_attention_kernel(%arg0: i32, %arg1: i32, %arg2: memref<2x8x32xf32, #tpu.memory_space<vmem>>, %arg3: memref<2x32xf32, #tpu.memory_space<vmem>>, %arg4: memref<32x32xf32, #tpu.memory_space<vmem>>, %arg5: memref<1x32xf32, #tpu.memory_space<vmem>>, %arg6: memref<2x8xf32, #tpu.memory_space<vmem>>, %arg7: memref<1x2x8xf32, #tpu.memory_space<vmem>>) attributes {dimension_semantics = [#tpu.dimension_semantics<parallel>, #tpu.dimension_semantics<arbitrary>], iteration_bounds = array<i64: 1, 1>, scalar_prefetch = 0 : i64, scratch_operands = 1 : i64, tpu.core_type = #tpu.core_type<tc>, window_params = [{transform_indices = @transform_0, window_bounds = array<i64: 2, 8, 32>}, {transform_indices = @transform_1, window_bounds = array<i64: 2, 32>}, {pipeline_mode = #tpu.pipeline_mode<synchronous>, transform_indices = @transform_2, window_bounds = array<i64: 32, 32>}, {pipeline_mode = #tpu.pipeline_mode<synchronous>, transform_indices = @transform_3, window_bounds = array<i64: 1, 32>}, {transform_indices = @transform_4, window_bounds = array<i64: 2, 8>}]} {
    %c0 = arith.constant 0 : index
    %c0_0 = arith.constant 0 : index
    %c0_1 = arith.constant 0 : index
    %0 = vector.load %arg2[%c0, %c0_0, %c0_1] : memref<2x8x32xf32, #tpu.memory_space<vmem>>, vector<2x8x32xf32>
    %1 = vector.shape_cast %0 : vector<2x8x32xf32> to vector<16x32xf32>
    %c0_2 = arith.constant 0 : index
    %c0_3 = arith.constant 0 : index
    %2 = vector.load %arg4[%c0_2, %c0_3] : memref<32x32xf32, #tpu.memory_space<vmem>>, vector<32x32xf32>
    %cst = arith.constant dense<0.000000e+00> : vector<16x32xf32>
    %3 = tpu.matmul %1, %2, %cst {dimension_numbers = #tpu.dot_dimension_numbers<[1], [0], [0], [1], [0, 0, 1, 1], [], []>} : vector<16x32xf32>, vector<32x32xf32>, vector<16x32xf32> -> vector<16x32xf32>
    %4 = vector.shape_cast %3 : vector<16x32xf32> to vector<2x8x32xf32>
    %c0_4 = arith.constant 0 : index
    %c0_5 = arith.constant 0 : index
    %5 = vector.load %arg3[%c0_4, %c0_5] : memref<2x32xf32, #tpu.memory_space<vmem>>, vector<2x32xf32>
    %6 = vector.shape_cast %5 : vector<2x32xf32> to vector<2x1x32xf32>
    %7 = vector.broadcast %6 : vector<2x1x32xf32> to vector<2x8x32xf32>
    %8 = arith.addf %4, %7 : vector<2x8x32xf32>
    %9 = math.tanh %8 : vector<2x8x32xf32>
    %c0_6 = arith.constant 0 : index
    %c0_7 = arith.constant 0 : index
    %10 = vector.load %arg5[%c0_6, %c0_7] : memref<1x32xf32, #tpu.memory_space<vmem>>, vector<1x32xf32>
    %11 = vector.shape_cast %10 : vector<1x32xf32> to vector<1x1x32xf32>
    %12 = vector.broadcast %11 : vector<1x1x32xf32> to vector<2x8x32xf32>
    %13 = arith.mulf %9, %12 : vector<2x8x32xf32>
    %cst_8 = arith.constant dense<0.000000e+00> : vector<2x8xf32>
    %14 = vector.multi_reduction <add>, %13, %cst_8 [2] : vector<2x8x32xf32> to vector<2x8xf32>
    %cst_9 = arith.constant dense<0xFF800000> : vector<2xf32>
    %15 = vector.multi_reduction <maximumf>, %14, %cst_9 [1] : vector<2x8xf32> to vector<2xf32>
    %16 = vector.shape_cast %15 : vector<2xf32> to vector<2x1xf32>
    %17 = vector.broadcast %16 : vector<2x1xf32> to vector<2x8xf32>
    %18 = arith.subf %14, %17 : vector<2x8xf32>
    %19 = math.exp %18 : vector<2x8xf32>
    %cst_10 = arith.constant dense<0.000000e+00> : vector<2xf32>
    %20 = vector.multi_reduction <add>, %19, %cst_10 [1] : vector<2x8xf32> to vector<2xf32>
    %21 = vector.shape_cast %20 : vector<2xf32> to vector<2x1xf32>
    %22 = tpu.reciprocal %21 : vector<2x1xf32> -> vector<2x1xf32>
    %23 = vector.broadcast %22 : vector<2x1xf32> to vector<2x8xf32>
    %24 = arith.mulf %19, %23 : vector<2x8xf32>
    %c0_11 = arith.constant 0 : index
    %c0_12 = arith.constant 0 : index
    %25 = vector.load %arg6[%c0_11, %c0_12] : memref<2x8xf32, #tpu.memory_space<vmem>>, vector<2x8xf32>
    tpu.vector_store %arg6[%c0_11, %c0_12], %24 {strides = array<i32>} : memref<2x8xf32, #tpu.memory_space<vmem>>, vector<2x8xf32>,
    return
  }
  func.func @transform_0(%arg0: i32, %arg1: i32) -> (i32, i32, i32) {
    %c0_i32 = arith.constant 0 : i32
    %c0_i32_0 = arith.constant 0 : i32
    return %arg0, %arg1, %c0_i32 : i32, i32, i32
  }
  func.func @transform_1(%arg0: i32, %arg1: i32) -> (i32, i32) {
    %c0_i32 = arith.constant 0 : i32
    %c0_i32_0 = arith.constant 0 : i32
    return %arg0, %c0_i32 : i32, i32
  }
  func.func @transform_2(%arg0: i32, %arg1: i32) -> (i32, i32) {
    %c0_i32 = arith.constant 0 : i32
    %c0_i32_0 = arith.constant 0 : i32
    %c0_i32_1 = arith.constant 0 : i32
    return %c0_i32, %c0_i32_0 : i32, i32
  }
  func.func @transform_3(%arg0: i32, %arg1: i32) -> (i32, i32) {
    %c0_i32 = arith.constant 0 : i32
    %c0_i32_0 = arith.constant 0 : i32
    %c0_i32_1 = arith.constant 0 : i32
    return %c0_i32, %c0_i32_0 : i32, i32
  }
  func.func @transform_4(%arg0: i32, %arg1: i32) -> (i32, i32) {
    %c0_i32 = arith.constant 0 : i32
    %c0_i32_0 = arith.constant 0 : i32
    return %arg0, %c0_i32 : i32, i32
  }
}

</mosaic_0001>

<llo_original>
// kernel: tpu_custom_call.1
$region0: #{tpu_custom_call.1}
  #allocation0 [shape = 'u32[]', space=smem, size = 0x4, offset = 0x4, fixed_abs, tag = 'smem constant byte address 0x4 - core index']
  #allocation1 [shape = 'u32[144,128]{1,0:T(1,128)}', space=vmem, size = 0x12000, scoped, tag = 'internal scratch']
  #allocation2 [shape = 'f32[1,2,8]{2,1,0:T(2,128)}', space=vmem, size = 0x400, scoped, tag = 'scratch operand']
  %s0 = inlined_call_operand.hbm [shape: f32[2,8,32], index: 0, kind: input, shape index: {}]
  %s1 = inlined_call_operand.vmem [shape: f32[2,32], index: 1, kind: input, shape index: {}]
  %s2 = inlined_call_operand.hbm [shape: f32[32,32], index: 2, kind: input, shape index: {}]
  %s3 = inlined_call_operand.vmem [shape: f32[1,32], index: 3, kind: input, shape index: {}]
  %s4 = inlined_call_operand.hbm [shape: f32[2,8], index: 4, kind: output, shape index: {}]
  %s5 = sld [smem:[#allocation0]]
  $region34: #{tpu_custom_call.1} parent=0
    _
  %s7 = ssub.s32 1, %s5
  %s8 = scalar_select 0, %s7, %s5
  $region1: #{tpu_custom_call.1} parent=0
    #allocation3 [shape = 'u8[8192]{0}', space=vmem, size = 0x2000, scoped, tag = 'input window, operand 0, single buffered']
    #allocation4 [shape = 's32[1]{0}', space=sflag, size = 0x4, scoped, tag = 'scoped memory for tpu_custom_call.1']
    #allocation5 [shape = 's32[1]{0}', space=sflag, size = 0x4, scoped, tag = 'scoped memory for tpu_custom_call.1']
    #allocation6 [shape = 'u8[16384]{0}', space=vmem, size = 0x4000, scoped, tag = 'input window, operand 2, single buffered']
    #allocation7 [shape = 's32[1]{0}', space=sflag, size = 0x4, scoped, tag = 'scoped memory for tpu_custom_call.1']
    #allocation8 [shape = 'u8[1024]{0}', space=vmem, size = 0x400, scoped, tag = 'output window, operand 0, single buffered']
    %9 = vsyncpa [#allocation4], 0
    %10 = vsyncpa [#allocation7], 0
    %11 = vsyncpa [#allocation5], 0
    // Predicated region
    $region2: #{tpu_custom_call.1} parent=1 // pred_check
      _
    $region3: #{tpu_custom_call.1} parent=1 // pred_check_branch
      %13 = sbr.rel (0) target = $region5
    $region4: #{tpu_custom_call.1} parent=1 // pred_region
      %s15 = ssub.s32 256, 256
      %16 = vsyncadd [#allocation4], %s15
      %s17 = sshll.u32 [#allocation3], 4
      %s18 = int_to_ptr.vmem [resolvable:$true] %s17
      %23 = dma.hbm_to_vmem [thread:$0]  %s0, 256, %s18, [#allocation4], 128, 128, 8
    $region5: #{tpu_custom_call.1} parent=1 // pred_fallthru
      _
    // Predicated region
    $region6: #{tpu_custom_call.1} parent=1 // pred_check
      _
    $region7: #{tpu_custom_call.1} parent=1 // pred_check_branch
      %25 = sbr.rel (0) target = $region9
    $region8: #{tpu_custom_call.1} parent=1 // pred_region
      _
    $region9: #{tpu_custom_call.1} parent=1 // pred_fallthru
      _
    // Predicated region
    $region10: #{tpu_custom_call.1} parent=1 // pred_check
      _
    $region11: #{tpu_custom_call.1} parent=1 // pred_check_branch
      %27 = sbr.rel (0) target = $region13
    $region12: #{tpu_custom_call.1} parent=1 // pred_region
      %s29 = ssub.s32 512, 512
      %30 = vsyncadd [#allocation7], %s29
      %s31 = sshll.u32 [#allocation6], 4
      %s32 = int_to_ptr.vmem [resolvable:$true] %s31
      %37 = dma.hbm_to_vmem [thread:$0]  %s2, 512, %s32, [#allocation7], 128, 128, 8
    $region13: #{tpu_custom_call.1} parent=1 // pred_fallthru
      _
    // Predicated region
    $region14: #{tpu_custom_call.1} parent=1 // pred_check
      _
    $region15: #{tpu_custom_call.1} parent=1 // pred_check_branch
      %39 = sbr.rel (0) target = $region17
    $region16: #{tpu_custom_call.1} parent=1 // pred_region
      _
    $region17: #{tpu_custom_call.1} parent=1 // pred_fallthru
      _
    // Predicated region
    $region18: #{tpu_custom_call.1} parent=1 // pred_check
      _
    $region19: #{tpu_custom_call.1} parent=1 // pred_check_branch
      %41 = sbr.rel (0) target = $region21
    $region20: #{tpu_custom_call.1} parent=1 // pred_region
      %42 = dma.done [#allocation4], 256
    $region21: #{tpu_custom_call.1} parent=1 // pred_fallthru
      _
    // Predicated region
    $region22: #{tpu_custom_call.1} parent=1 // pred_check
      _
    $region23: #{tpu_custom_call.1} parent=1 // pred_check_branch
      %44 = sbr.rel (0) target = $region25
    $region24: #{tpu_custom_call.1} parent=1 // pred_region
      %45 = dma.done [#allocation7], 512
    $region25: #{tpu_custom_call.1} parent=1 // pred_fallthru
      _
    %v46 = vld [vmem:[#allocation3] sm:$0xff]
    %v47 = vld [vmem:[#allocation3 + $0x8] sm:$0xff]
    %v48 = vld [vmem:[#allocation6] sm:$0xff]
    %v49 = vld [vmem:[#allocation6 + $0x8] sm:$0xff]
    %v50 = vld [vmem:[#allocation6 + $0x10] sm:$0xff]
    %v51 = vld [vmem:[#allocation6 + $0x18] sm:$0xff]
    %vm52 = vcmask 261120
    %v54 = vsel %vm52, %v46, 0
    %v57 = vsel %vm52, %v47, 0
    %59 = vmatprep.subr.mxu0 0.0
    %60 = vmatpush1.msra.mxu0 %v48
    %61 = vmatprep.subr.mxu0 0.0
    %62 = vmatpush1.msra.mxu0 %v49
    %63 = vmatprep.subr.mxu0 0.0
    %64 = vmatpush1.msra.mxu0 %v50
    %65 = vmatprep.subr.mxu0 0.0
    %66 = vmatpush1.msra.mxu0 %v51
    %67 = vmatprep.subr.mxu0 0.0
    %68 = vmatpush1.msra.mxu0 0.0
    %69 = vmatprep.subr.mxu0 0.0
    %70 = vmatpush1.msra.mxu0 0.0
    %71 = vmatprep.subr.mxu0 0.0
    %72 = vmatpush1.msra.mxu0 0.0
    %73 = vmatprep.subr.mxu0 0.0
    %74 = vmatpush1.msra.mxu0 0.0
    %75 = vmatprep.subr.mxu0 0.0
    %76 = vmatpush1.msra.mxu0 0.0
    %77 = vmatprep.subr.mxu0 0.0
    %78 = vmatpush1.msra.mxu0 0.0
    %79 = vmatprep.subr.mxu0 0.0
    %80 = vmatpush1.msra.mxu0 0.0
    %81 = vmatprep.subr.mxu0 0.0
    %82 = vmatpush1.msra.mxu0 0.0
    %83 = vmatprep.subr.mxu0 0.0
    %84 = vmatpush1.msra.mxu0 0.0
    %85 = vmatprep.subr.mxu0 0.0
    %86 = vmatpush1.msra.mxu0 0.0
    %87 = vmatprep.subr.mxu0 0.0
    %88 = vmatpush1.msra.mxu0 0.0
    %89 = vmatprep.subr.mxu0 0.0
    %90 = vmatpush1.msra.mxu0 0.0
    %91 = vmatprep.subr.mxu0 0.0
    %92 = vmatpush1.msra.mxu0 0.0
    %93 = vmatprep.subr.mxu0 0.0
    %94 = vmatpush1.msra.mxu0 0.0
    %95 = vmatprep.subr.mxu0 0.0
    %96 = vmatpush1.msra.mxu0 0.0
    %97 = vmatprep.subr.mxu0 0.0
    %98 = vmatpush1.msra.mxu0 0.0
    %99 = vmatprep.subr.mxu0 0.0
    %100 = vmatpush1.msra.mxu0 0.0
    %101 = vmatprep.subr.mxu0 0.0
    %102 = vmatpush1.msra.mxu0 0.0
    %103 = vmatprep.subr.mxu0 0.0
    %104 = vmatpush1.msra.mxu0 0.0
    %105 = vmatprep.subr.mxu0 0.0
    %106 = vmatpush1.msra.mxu0 0.0
    %107 = vmatprep.subr.mxu0 0.0
    %108 = vmatpush1.msra.mxu0 0.0
    %109 = vmatprep.subr.mxu0 0.0
    %110 = vmatpush1.msra.mxu0 0.0
    %111 = vmatprep.subr.mxu0 0.0
    %112 = vmatpush1.msra.mxu0 0.0
    %113 = vmatprep.subr.mxu0 0.0
    %114 = vmatpush1.msra.mxu0 0.0
    %115 = vmatprep.subr.mxu0 0.0
    %116 = vmatpush1.msra.mxu0 0.0
    %117 = vmatprep.subr.mxu0 0.0
    %118 = vmatpush1.msra.mxu0 0.0
    %119 = vmatprep.subr.mxu0 0.0
    %120 = vmatpush1.msra.mxu0 0.0
    %121 = vmatprep.subr.mxu0 0.0
    %122 = vmatpush1.msra.mxu0 0.0
    %123 = vmatprep.mubr.f32.mxu0 0.0
    %124 = vmatmul.mubr.f32.gmra.mrb[0].mxu0 %v54
    %v125 = vpop.f32.mrb[0].mxu0
    %v126 = vadd.f32 0.0, %v125
    %v127 = vpop.f32.mrb[0].mxu0
    %128 = vmatprep.mubr.f32.mxu0 0.0
    %129 = vmatmul.mubr.f32.gmra.mrb[0].mxu0 %v57
    %v130 = vpop.f32.mrb[0].mxu0
    %v131 = vadd.f32 0.0, %v130
    %v132 = vpop.f32.mrb[0].mxu0
    %133 = vdwg.mxu0
    %v134 = vld [vmem:[%s1] sm:$0x3]
    %v137 = vunpack.c.l.s4 1966171168
    %v138 = vunpack.c.0.s8 %v137
    %v139 = vlaneseq
    %v140 = vshrl.u32 %v139, 7
    %v141 = vsub.s32 %v138, %v140
    %v142 = vrot.slane %v134, %v141
    %v143 = vcombine.high %v142, %v142
    %v145 = vunpack.c.l.s4 1966171168
    %v146 = vunpack.c.0.s8 %v145
    %v147 = vlaneseq
    %v148 = vshrl.u32 %v147, 7
    %v149 = vsub.s32 %v146, %v148
    %v150 = vrot.slane %v142, %v149
    %v152 = vunpack.c.l.s4 1966171168
    %v153 = vunpack.c.0.s8 %v152
    %v154 = vlaneseq
    %v155 = vshrl.u32 %v154, 7
    %v156 = vsub.s32 %v153, %v155
    %v157 = vrot.slane %v143, %v156
    %v158 = vlaneseq
    %v159 = vshrl.u32 %v158, 7
    %v160 = vsub.s32 0, %v159
    %v161 = vrot.slane %v150, %v160
    %v162 = vlaneseq
    %v163 = vshrl.u32 %v162, 7
    %v164 = vsub.s32 0, %v163
    %v165 = vrot.slane %v157, %v164
    %v168 = vadd.f32 %v126, %v161
    %v169 = vadd.f32 %v131, %v165
    %v170 = vtanh.pop %v168
    %v171 = vtanh.pop %v169
    %v172 = vld [vmem:[%s3] sm:$0x1]
    %v174 = vlaneseq
    %v175 = vshrl.u32 %v174, 7
    %v176 = vsub.s32 0, %v175
    %v177 = vrot.slane %v172, %v176
    %v179 = vmul.f32 %v170, %v177
    %v180 = vmul.f32 %v171, %v177
    %v181 = vsel %vm52, %v179, 0.0
    %182 = vadd.xlane.f32.xlu0 %v181
    %v183 = vpop.xlane.xlu0 %182
    %v184 = vsel %vm52, %v180, 0.0
    %185 = vadd.xlane.f32.xlu0 %v184
    %v186 = vpop.xlane.xlu0 %185
    %v189 = vlaneseq
    %v190 = vand.u32 %v189, 127
    %v191 = vlaneseq
    %v192 = vshrl.u32 %v191, 7
    %v193 = vsub.s32 %v190, %v192
    %v194 = vrot.slane %v183, %v193
    %v195 = vlaneseq
    %v196 = vshrl.u32 %v195, 7
    %v197 = vsub.s32 %v190, %v196
    %v198 = vrot.slane %v186, %v197
    %vm199 = vcmask 1041409
    %v200 = vsel %vm199, %v198, %v194
    %vm202 = vcmask 58368
    %v203 = vsel %vm202, %v200, -inf
    %204 = vmax.xlane.f32.xlu0 %v203
    %v205 = vpop.xlane.xlu0 %204
    %v207 = vlaneseq
    %v208 = vshrl.u32 %v207, 7
    %v209 = vsub.s32 0, %v208
    %v210 = vrot.slane %v205, %v209
    %v211 = vlaneseq
    %v212 = vshrl.u32 %v211, 7
    %v213 = vsub.s32 1, %v212
    %v214 = vrot.slane %v205, %v213
    %v217 = vsub.f32 %v183, %v210
    %v218 = vsub.f32 %v186, %v214
    %v219 = vmul.f32 %v217, 1.442695
    %v220 = vpow.pop %v219
    %v221 = vmul.f32 %v218, 1.442695
    %v222 = vpow.pop %v221
    %225 = vset.pattern.permute.xlu0 0
    %226 = vperm.xlu0 %225, %v220
    %v227 = vpop.permute.xlu0 %226
    %228 = vset.pattern.permute.xlu0 0
    %229 = vperm.xlu0 %228, %v222
    %v230 = vpop.permute.xlu0 %229
    %v231 = vlaneseq
    %v232 = vshrl.u32 %v231, 7
    %v233 = vsub.s32 %v190, %v232
    %v234 = vrot.slane %v227, %v233
    %v235 = vlaneseq
    %v236 = vshrl.u32 %v235, 7
    %v237 = vsub.s32 %v190, %v236
    %v238 = vrot.slane %v230, %v237
    %v239 = vsel %vm199, %v238, %v234
    %v241 = vsel %vm202, %v239, 0.0
    %242 = vadd.xlane.f32.xlu0 %v241
    %v243 = vpop.xlane.xlu0 %242
    %v244 = vrcp.pop %v243
    %v246 = vlaneseq
    %v247 = vshrl.u32 %v246, 7
    %v248 = vsub.s32 0, %v247
    %v249 = vrot.slane %v244, %v248
    %v250 = vlaneseq
    %v251 = vshrl.u32 %v250, 7
    %v252 = vsub.s32 1, %v251
    %v253 = vrot.slane %v244, %v252
    %v256 = vmul.f32 %v220, %v249
    %v257 = vmul.f32 %v222, %v253
    %260 = vset.pattern.permute.xlu0 0
    %261 = vperm.xlu0 %260, %v256
    %v262 = vpop.permute.xlu0 %261
    %263 = vset.pattern.permute.xlu0 0
    %264 = vperm.xlu0 %263, %v257
    %v265 = vpop.permute.xlu0 %264
    %v266 = vlaneseq
    %v267 = vshrl.u32 %v266, 7
    %v268 = vsub.s32 %v190, %v267
    %v269 = vrot.slane %v262, %v268
    %v270 = vlaneseq
    %v271 = vshrl.u32 %v270, 7
    %v272 = vsub.s32 %v190, %v271
    %v273 = vrot.slane %v265, %v272
    %v274 = vsel %vm199, %v273, %v269
    %276 = vst.msk [vmem:[#allocation8] sm:$0x3] %vm202, %v274
    // Predicated region
    $region26: #{tpu_custom_call.1} parent=1 // pred_check
      _
    $region27: #{tpu_custom_call.1} parent=1 // pred_check_branch
      %278 = sbr.rel (0) target = $region29
    $region28: #{tpu_custom_call.1} parent=1 // pred_region
      %s280 = ssub.s32 32, 32
      %281 = vsyncadd [#allocation5], %s280
      %s283 = sshll.u32 [#allocation8], 4
      %s284 = int_to_ptr.vmem [resolvable:$true] %s283
      %286 = dma.vmem_to_hbm [thread:$0]  %s284, 32, %s4, [#allocation5]
    $region29: #{tpu_custom_call.1} parent=1 // pred_fallthru
      _
    // Predicated region
    $region30: #{tpu_custom_call.1} parent=1 // pred_check
      _
    $region31: #{tpu_custom_call.1} parent=1 // pred_check_branch
      %288 = sbr.rel (0) target = $region33
    $region32: #{tpu_custom_call.1} parent=1 // pred_region
      %289 = dma.done [#allocation5], 32
    $region33: #{tpu_custom_call.1} parent=1 // pred_fallthru
      _
    %290 = vsyncpa [#allocation4], 1
    %291 = vsyncpa [#allocation7], 1
    %292 = vsyncpa [#allocation5], 1

</llo_original>
